<compile_context>
chip_gen: v7x
topology: tpu7x:2x2x1
jax: 0.10.0
libtpu: 0.0.40
codegen_flags: <defaults>
</compile_context>

<pallas_src>
import jax
import jax.numpy as jnp
from jax.experimental import pallas as pl
from jax.experimental.pallas import tpu as pltpu

_LANE = 128      # lane width of a vreg
_SUBLANE = 8     # sublane height of a vreg (f32)


def _round_up(n, m):
    return (n + m - 1) // m * m


def _mlp_kernel(xt_ref, params_ref, o_ref):
    # xt     : (1, Bp)           batch on the lane axis
    # params : (3*Hp + 1, 1)     [w1 col | b1 col | w2 col | b2 scalar]
    # o      : (1, Bp)           lane-dense output
    Hp = (params_ref.shape[0] - 1) // 3     # static at trace time

    x_row = xt_ref[...]                     # (1, Bp)
    p = params_ref[...]                     # (3*Hp + 1, 1)

    # Static, sublane-aligned slices (Hp is a multiple of 8) -> just vreg picks.
    w1c = p[0:Hp, :]                        # (Hp, 1)
    b1c = p[Hp:2 * Hp, :]                   # (Hp, 1)
    w2c = p[2 * Hp:3 * Hp, :]               # (Hp, 1)
    b2 = p[3 * Hp:3 * Hp + 1, :]            # (1, 1)

    # Layer 1: K = n_feature = 1 -> pure VPU broadcast multiply (no MXU).
    h = jnp.maximum(w1c * x_row + b1c, 0.0)             # (Hp, Bp)

    # Layer 2: N = n_output = 1 -> VPU multiply; accumulate in f32.
    prod = (h * w2c).astype(jnp.float32)                 # (Hp, Bp)

    # Cross-vreg partial sums on the VALU (sublane-aligned static slices),
    # then a single 8-sublane XLU reduction.
    partial = prod[0:_SUBLANE, :]                         # (8, Bp)
    for i in range(1, Hp // _SUBLANE):
        partial = partial + prod[_SUBLANE * i:_SUBLANE * (i + 1), :]
    out = jnp.sum(partial, axis=0, keepdims=True)         # (1, Bp)

    o_ref[...] = (out + b2).astype(o_ref.dtype)


def prepare_params(w1, b1, w2, b2, dtype=jnp.float32):
    """One-time packing of all parameters into a single column operand.

    w1: (1, n_hidden), b1: (1, n_hidden), w2: (n_hidden, 1), b2: (1, 1)
    Returns packed array of shape (3*Hp + 1, 1):
        rows [0, Hp)      -> w1 (zero-padded)
        rows [Hp, 2Hp)    -> b1 (zero-padded)
        rows [2Hp, 3Hp)   -> w2 (zero-padded)
        row  3Hp          -> b2 scalar
    Zero padding keeps the padded hidden rows mathematically inert.
    """
    n_feature, n_hidden = w1.shape
    assert n_feature == 1 and w2.shape == (n_hidden, 1)
    Hp = _round_up(n_hidden, _SUBLANE)

    packed = jnp.zeros((3 * Hp + 1, 1), dtype)
    packed = packed.at[:n_hidden, 0].set(w1[0, :].astype(dtype))
    packed = packed.at[Hp:Hp + n_hidden, 0].set(b1[0, :].astype(dtype))
    packed = packed.at[2 * Hp:2 * Hp + n_hidden, 0].set(w2[:, 0].astype(dtype))
    packed = packed.at[3 * Hp, 0].set(jnp.asarray(b2, dtype).reshape(()))
    return packed


def net_forward(x, packed_params):
    """Forward pass: relu(x @ w1 + b1) @ w2 + b2, params pre-packed.

    x: (B, 1) -> returns (B, 1).
    """
    B, n_feature = x.shape
    assert n_feature == 1
    Hp = (packed_params.shape[0] - 1) // 3
    Bp = _round_up(B, _LANE)            # 100 -> 128: unmasked, lane-dense tiles
    dtype = x.dtype

    # Single fused re-layout op: batch onto the lane axis, zero-pad to 128.
    xt = jnp.pad(x.T, ((0, 0), (0, Bp - B)))              # (1, Bp)

    itemsize = jnp.dtype(dtype).itemsize
    flops = 2 * B * (1 * Hp + Hp * 1)
    bytes_accessed = itemsize * (Bp + (3 * Hp + 1) + Bp)  # inputs + output

    vmem = pl.BlockSpec(memory_space=pltpu.MemorySpace.VMEM)
    out_t = pl.pallas_call(
        _mlp_kernel,
        out_shape=jax.ShapeDtypeStruct((1, Bp), dtype),
        in_specs=[vmem, vmem],
        out_specs=vmem,
        cost_estimate=pl.CostEstimate(
            flops=flops, transcendentals=0, bytes_accessed=bytes_accessed),
    )(xt, packed_params)

    # Padded lanes (cols B..Bp-1) hold relu(b1)·w2 + b2 junk -> keep the :B slice.
    # (1, B) row-major reshapes directly to (B, 1).
    return out_t[:, :B].reshape(B, 1)


def init_params(key, n_feature, n_hidden, n_output, dtype=jnp.float32):
    """Deterministic init mimicking torch.nn.Linear's U(-1/sqrt(fan_in), 1/sqrt(fan_in))."""
    k1, k2, k3, k4 = jax.random.split(key, 4)
    bound1 = 1.0 / jnp.sqrt(jnp.asarray(n_feature, dtype))
    bound2 = 1.0 / jnp.sqrt(jnp.asarray(n_hidden, dtype))
    w1 = jax.random.uniform(k1, (n_feature, n_hidden), dtype, -bound1, bound1)
    b1 = jax.random.uniform(k2, (1, n_hidden), dtype, -bound1, bound1)
    w2 = jax.random.uniform(k3, (n_hidden, n_output), dtype, -bound2, bound2)
    b2 = jax.random.uniform(k4, (1, n_output), dtype, -bound2, bound2)
    return w1, b1, w2, b2


if __name__ == "__main__":
    # Matches the reference script: x = unsqueeze(linspace(-1, 1, 100), dim=1)
    n_feature, n_hidden, n_output = 1, 32, 1
    batch = 100

    key = jax.random.PRNGKey(0)
    w1, b1, w2, b2 = init_params(key, n_feature, n_hidden, n_output)

    # One-time parameter packing (hoisted out of the per-call path).
    packed = prepare_params(w1, b1, w2, b2)

    x = jnp.linspace(-1.0, 1.0, batch, dtype=jnp.float32)[:, None]  # (100, 1)

    fwd = jax.jit(net_forward)
    out = fwd(x, packed)
    out = jax.block_until_ready(out)

    # Sanity check against pure-JAX reference of the PyTorch forward.
    ref = jnp.maximum(x @ w1 + b1, 0.0) @ w2 + b2
    assert out.shape == (batch, n_output)
    assert jnp.allclose(out, ref, atol=1e-5, rtol=1e-5)

    print("KERNEL_OK")
</pallas_src>

<mosaic_0001>
module attributes {stable_mosaic.version = 11 : i64} {
  func.func @_mlp_kernel(%arg0: memref<1x128xf32, #tpu.memory_space<vmem>>, %arg1: memref<97x1xf32, #tpu.memory_space<vmem>>, %arg2: memref<1x128xf32, #tpu.memory_space<vmem>>) attributes {dimension_semantics = [], scalar_prefetch = 0 : i64, scratch_operands = 0 : i64, tpu.core_type = #tpu.core_type<tc>} {
    %c0 = arith.constant 0 : index
    %c0_0 = arith.constant 0 : index
    %0 = vector.load %arg0[%c0, %c0_0] : memref<1x128xf32, #tpu.memory_space<vmem>>, vector<1x128xf32>
    %c0_1 = arith.constant 0 : index
    %c0_2 = arith.constant 0 : index
    %1 = vector.load %arg1[%c0_1, %c0_2] : memref<97x1xf32, #tpu.memory_space<vmem>>, vector<97x1xf32>
    %2 = vector.extract_strided_slice %1 {offsets = [0, 0], sizes = [32, 1], strides = [1, 1]} : vector<97x1xf32> to vector<32x1xf32>
    %3 = vector.extract_strided_slice %1 {offsets = [32, 0], sizes = [32, 1], strides = [1, 1]} : vector<97x1xf32> to vector<32x1xf32>
    %4 = vector.extract_strided_slice %1 {offsets = [64, 0], sizes = [32, 1], strides = [1, 1]} : vector<97x1xf32> to vector<32x1xf32>
    %5 = vector.extract_strided_slice %1 {offsets = [96, 0], sizes = [1, 1], strides = [1, 1]} : vector<97x1xf32> to vector<1x1xf32>
    %6 = vector.broadcast %2 : vector<32x1xf32> to vector<32x128xf32>
    %7 = vector.broadcast %0 : vector<1x128xf32> to vector<32x128xf32>
    %8 = arith.mulf %6, %7 : vector<32x128xf32>
    %9 = vector.broadcast %3 : vector<32x1xf32> to vector<32x128xf32>
    %10 = arith.addf %8, %9 : vector<32x128xf32>
    %cst = arith.constant 0.000000e+00 : f32
    %11 = vector.broadcast %cst : f32 to vector<32x128xf32>
    %12 = arith.maximumf %10, %11 : vector<32x128xf32>
    %13 = vector.broadcast %4 : vector<32x1xf32> to vector<32x128xf32>
    %14 = arith.mulf %12, %13 : vector<32x128xf32>
    %15 = vector.extract_strided_slice %14 {offsets = [0, 0], sizes = [8, 128], strides = [1, 1]} : vector<32x128xf32> to vector<8x128xf32>
    %16 = vector.extract_strided_slice %14 {offsets = [8, 0], sizes = [8, 128], strides = [1, 1]} : vector<32x128xf32> to vector<8x128xf32>
    %17 = arith.addf %15, %16 : vector<8x128xf32>
    %18 = vector.extract_strided_slice %14 {offsets = [16, 0], sizes = [8, 128], strides = [1, 1]} : vector<32x128xf32> to vector<8x128xf32>
    %19 = arith.addf %17, %18 : vector<8x128xf32>
    %20 = vector.extract_strided_slice %14 {offsets = [24, 0], sizes = [8, 128], strides = [1, 1]} : vector<32x128xf32> to vector<8x128xf32>
    %21 = arith.addf %19, %20 : vector<8x128xf32>
    %cst_3 = arith.constant dense<0.000000e+00> : vector<128xf32>
    %22 = vector.multi_reduction <add>, %21, %cst_3 [0] : vector<8x128xf32> to vector<128xf32>
    %23 = vector.shape_cast %22 : vector<128xf32> to vector<1x128xf32>
    %24 = vector.broadcast %5 : vector<1x1xf32> to vector<1x128xf32>
    %25 = arith.addf %23, %24 : vector<1x128xf32>
    %c0_4 = arith.constant 0 : index
    %c0_5 = arith.constant 0 : index
    %26 = vector.load %arg2[%c0_4, %c0_5] : memref<1x128xf32, #tpu.memory_space<vmem>>, vector<1x128xf32>
    tpu.vector_store %arg2[%c0_4, %c0_5], %25 {strides = array<i32>} : memref<1x128xf32, #tpu.memory_space<vmem>>, vector<1x128xf32>,
    return
  }
}

</mosaic_0001>

<llo_original>
// kernel: net_forward.1
$region0: #{net_forward.1}
  #allocation0 [shape = 'u32[]', space=smem, size = 0x4, offset = 0x4, fixed_abs, tag = 'smem constant byte address 0x4 - core index']
  #allocation1 [shape = 'u32[144,128]{1,0:T(1,128)}', space=vmem, size = 0x12000, scoped, tag = 'internal scratch']
  %s0 = inlined_call_operand.vmem [shape: f32[1,128], index: 0, kind: input, shape index: {}]
  %s1 = inlined_call_operand.vmem [shape: f32[97,1], index: 1, kind: input, shape index: {}]
  %s2 = inlined_call_operand.vmem [shape: f32[1,128], index: 2, kind: output, shape index: {}]
  %s3 = sld [smem:[#allocation0]]
  $region18: #{net_forward.1} parent=0
    _
  %s5 = ssub.s32 1, %s3
  %s6 = scalar_select 0, %s5, %s3
  // Predicated region
  $region2: #{net_forward.1} parent=0 // pred_check
    _
  $region3: #{net_forward.1} parent=0 // pred_check_branch
    %8 = sbr.rel (0) target = $region5
  $region4: #{net_forward.1} parent=0 // pred_region
    _
  $region5: #{net_forward.1} parent=0 // pred_fallthru
    _
  // Predicated region
  $region6: #{net_forward.1} parent=0 // pred_check
    _
  $region7: #{net_forward.1} parent=0 // pred_check_branch
    %10 = sbr.rel (0) target = $region9
  $region8: #{net_forward.1} parent=0 // pred_region
    _
  $region9: #{net_forward.1} parent=0 // pred_fallthru
    _
  %v11 = vld [vmem:[%s0] sm:$0x1]
  %v12 = vld [vmem:[%s1] sm:$0xff]
  %v13 = vld [vmem:[%s1 + $0x8] sm:$0xff]
  %v14 = vld [vmem:[%s1 + $0x10] sm:$0xff]
  %v15 = vld [vmem:[%s1 + $0x18] sm:$0xff]
  %v16 = vld [vmem:[%s1 + $0x20] sm:$0xff]
  %v17 = vld [vmem:[%s1 + $0x28] sm:$0xff]
  %v18 = vld [vmem:[%s1 + $0x30] sm:$0xff]
  %v19 = vld [vmem:[%s1 + $0x38] sm:$0xff]
  %v20 = vld [vmem:[%s1 + $0x40] sm:$0xff]
  %v21 = vld [vmem:[%s1 + $0x48] sm:$0xff]
  %v22 = vld [vmem:[%s1 + $0x50] sm:$0xff]
  %v23 = vld [vmem:[%s1 + $0x58] sm:$0xff]
  %v24 = vld [vmem:[%s1 + $0x60] sm:$0x1]
  %26 = vset.pattern.permute.xlu0 0
  %27 = vperm.xlu0 %26, %v12
  %v28 = vpop.permute.xlu0 %27
  %31 = vset.pattern.permute.xlu0 0
  %32 = vperm.xlu0 %31, %v13
  %v33 = vpop.permute.xlu0 %32
  %36 = vset.pattern.permute.xlu0 0
  %37 = vperm.xlu0 %36, %v14
  %v38 = vpop.permute.xlu0 %37
  %41 = vset.pattern.permute.xlu0 0
  %42 = vperm.xlu0 %41, %v15
  %v43 = vpop.permute.xlu0 %42
  %v46 = vlaneseq
  %v47 = vshrl.u32 %v46, 7
  %v48 = vsub.s32 0, %v47
  %v49 = vrot.slane %v11, %v48
  %v51 = vmul.f32 %v28, %v49
  %v52 = vmul.f32 %v33, %v49
  %v53 = vmul.f32 %v38, %v49
  %v54 = vmul.f32 %v43, %v49
  %56 = vset.pattern.permute.xlu0 0
  %57 = vperm.xlu0 %56, %v16
  %v58 = vpop.permute.xlu0 %57
  %61 = vset.pattern.permute.xlu0 0
  %62 = vperm.xlu0 %61, %v17
  %v63 = vpop.permute.xlu0 %62
  %66 = vset.pattern.permute.xlu0 0
  %67 = vperm.xlu0 %66, %v18
  %v68 = vpop.permute.xlu0 %67
  %71 = vset.pattern.permute.xlu0 0
  %72 = vperm.xlu0 %71, %v19
  %v73 = vpop.permute.xlu0 %72
  %v75 = vadd.f32 %v51, %v58
  %v76 = vadd.f32 %v52, %v63
  %v77 = vadd.f32 %v53, %v68
  %v78 = vadd.f32 %v54, %v73
  %v79 = vmax.f32 %v75, 0.0
  %v80 = vmax.f32 %v76, 0.0
  %v81 = vmax.f32 %v77, 0.0
  %v82 = vmax.f32 %v78, 0.0
  %84 = vset.pattern.permute.xlu0 0
  %85 = vperm.xlu0 %84, %v20
  %v86 = vpop.permute.xlu0 %85
  %89 = vset.pattern.permute.xlu0 0
  %90 = vperm.xlu0 %89, %v21
  %v91 = vpop.permute.xlu0 %90
  %94 = vset.pattern.permute.xlu0 0
  %95 = vperm.xlu0 %94, %v22
  %v96 = vpop.permute.xlu0 %95
  %99 = vset.pattern.permute.xlu0 0
  %100 = vperm.xlu0 %99, %v23
  %v101 = vpop.permute.xlu0 %100
  %v103 = vmul.f32 %v79, %v86
  %v104 = vmul.f32 %v80, %v91
  %v105 = vmul.f32 %v81, %v96
  %v106 = vmul.f32 %v82, %v101
  %v107 = vadd.f32 %v103, %v104
  %v108 = vadd.f32 %v107, %v105
  %v109 = vadd.f32 %v108, %v106
  %v110 = vrot.slane %v109, 4
  %v111 = vadd.f32 %v109, %v110
  %v112 = vrot.slane %v111, 2
  %v113 = vadd.f32 %v111, %v112
  %v114 = vrot.slane %v113, 1
  %v115 = vadd.f32 %v113, %v114
  %117 = vset.pattern.permute.xlu0 0
  %118 = vperm.xlu0 %117, %v24
  %v119 = vpop.permute.xlu0 %118
  %v121 = vadd.f32 %v115, %v119
  %122 = vst [vmem:[%s2] sm:$0x1] %v121
  // Predicated region
  $region10: #{net_forward.1} parent=0 // pred_check
    _
  $region11: #{net_forward.1} parent=0 // pred_check_branch
    %124 = sbr.rel (0) target = $region13
  $region12: #{net_forward.1} parent=0 // pred_region
    _
  $region13: #{net_forward.1} parent=0 // pred_fallthru
    _
  // Predicated region
  $region14: #{net_forward.1} parent=0 // pred_check
    _
  $region15: #{net_forward.1} parent=0 // pred_check_branch
    %126 = sbr.rel (0) target = $region17
  $region16: #{net_forward.1} parent=0 // pred_region
    _
  $region17: #{net_forward.1} parent=0 // pred_fallthru
    _

</llo_original>
